<compile_context>
chip_gen: v5e
topology: v5e:2x2
jax: 0.10.0
libtpu: 0.0.40
codegen_flags: <defaults>
</compile_context>

<pallas_src>
import functools

import jax
import jax.numpy as jnp
import numpy as np
from jax.experimental import pallas as pl
from jax.experimental.pallas import tpu as pltpu

LANE = 128     # TPU lane width (last dim)
SUBLANE = 8    # TPU sublane width (second-to-last dim)


def _round_up(x, m):
    return (x + m - 1) // m * m


# ----------------------------------------------------------------------------
# Pallas kernel: fully fused MLP (chain of Linear + optional ReLU)
# ----------------------------------------------------------------------------
def _fused_mlp_kernel(x_ref, b_ref, *rest, relu_flags):
    """rest = (w0_ref, ..., w_{n-1}_ref, o_ref).

    x_ref:  (TM, D0_pad)      compute dtype (bf16)
    b_ref:  (n_layers, Bpad)  f32 packed biases
    w_i:    (Din_pad, Dout_pad) compute dtype (bf16)
    o_ref:  (TM, Dlast_pad)   f32
    """
    o_ref = rest[-1]
    w_refs = rest[:-1]
    n = len(w_refs)

    h = x_ref[...]                                    # already compute dtype
    for li, w_ref in enumerate(w_refs):               # unrolled at trace time
        w = w_ref[...]
        dout = w.shape[1]
        # bf16 operands -> MXU-native; f32 accumulation.
        y = jnp.dot(h, w, preferred_element_type=jnp.float32)
        y = y + b_ref[li:li + 1, :dout]               # f32 bias epilogue
        if relu_flags[li]:
            y = jnp.maximum(y, 0.0)
        # Inter-layer activations stay in the narrow compute dtype (half-size
        # VMEM intermediates, identical math to casting before the next dot);
        # the final layer result stays f32 for the output store.
        h = y.astype(w.dtype) if li < n - 1 else y
    o_ref[...] = h.astype(o_ref.dtype)


def _pick_tm(batch, tm_default=512):
    """Batch tile: large (step-overhead amortization) but always giving >=2
    grid steps when the batch permits, so the 'parallel' axis can shard
    across both TensorCores on v7x. Multiple of 8 (sublane)."""
    half = _round_up(max(pl.cdiv(batch, 2), 1), SUBLANE)
    return max(SUBLANE, min(tm_default, half))


def fused_mlp(x, weights, bias_packed, relu_flags, *, tm=512):
    """Apply a chain of Linear(+ReLU) layers in one pallas_call.

    x:           (B, D0_pad) compute dtype, D0_pad a multiple of 128.
    weights:     list of (Din_pad, Dout_pad) arrays, padded dims zero-filled.
    bias_packed: (n_layers, Bpad) float32, zero-padded rows.
    Returns:     (B, Dout_pad_last) float32.
    """
    B, din = x.shape
    dout = weights[-1].shape[1]
    tm = _pick_tm(B, tm)
    grid = (pl.cdiv(B, tm),)   # no host-side batch pad; ragged last block OK

    in_specs = [
        pl.BlockSpec((tm, din), lambda i: (i, 0)),
        # Constant block index -> stays resident in VMEM across the grid.
        pl.BlockSpec(bias_packed.shape, lambda i: (0, 0)),
    ]
    for w in weights:
        in_specs.append(pl.BlockSpec(w.shape, lambda i: (0, 0)))

    kernel = functools.partial(_fused_mlp_kernel, relu_flags=tuple(relu_flags))
    return pl.pallas_call(
        kernel,
        out_shape=jax.ShapeDtypeStruct((B, dout), jnp.float32),
        grid=grid,
        in_specs=in_specs,
        out_specs=pl.BlockSpec((tm, dout), lambda i: (i, 0)),
        compiler_params=pltpu.CompilerParams(
            dimension_semantics=("parallel",),   # batch axis -> megacore
        ),
    )(x, bias_packed, *weights)


# ----------------------------------------------------------------------------
# Parameter init (PyTorch nn.Linear default: U(+-1/sqrt(fan_in))), padded to
# lane-dense (multiple-of-128) shapes with zero fill.
# ----------------------------------------------------------------------------
def _init_linear_padded(key, din, dout, compute_dtype):
    kw, kb = jax.random.split(key)
    bound = 1.0 / (din ** 0.5)
    w = jax.random.uniform(kw, (din, dout), jnp.float32, -bound, bound)
    b = jax.random.uniform(kb, (dout,), jnp.float32, -bound, bound)
    din_p, dout_p = _round_up(din, LANE), _round_up(dout, LANE)
    w_p = jnp.zeros((din_p, dout_p), jnp.float32).at[:din, :dout].set(w)
    b_p = jnp.zeros((dout_p,), jnp.float32).at[:dout].set(b)
    return w_p.astype(compute_dtype), b_p   # bias stays f32 for the epilogue


def _pack_biases(biases):
    """Stack per-layer f32 bias vectors into one (n_layers, width) array."""
    width = max(b.shape[0] for b in biases)
    rows = [jnp.pad(b, (0, width - b.shape[0])) for b in biases]
    return jnp.stack(rows, axis=0)


# ----------------------------------------------------------------------------
# FeatureExtractor (MLP AutoEncoder) — forward pass as one Pallas kernel
# ----------------------------------------------------------------------------
class FeatureExtractorPallas:
    def __init__(self, key, input_dim, hidden_dims=(64, 64), latent_dim=10,
                 compute_dtype=jnp.bfloat16):
        self.input_dim = input_dim
        self.latent_dim = latent_dim
        self.compute_dtype = compute_dtype
        self.input_dim_pad = _round_up(input_dim, LANE)
        self.latent_dim_pad = _round_up(latent_dim, LANE)

        enc_dims = [input_dim] + list(hidden_dims) + [latent_dim]
        dec_dims = enc_dims[::-1]
        n_enc, n_dec = len(enc_dims) - 1, len(dec_dims) - 1
        keys = jax.random.split(key, n_enc + n_dec)

        enc_w, enc_b, dec_w, dec_b = [], [], [], []
        for k, (di, do) in zip(keys[:n_enc], zip(enc_dims[:-1], enc_dims[1:])):
            w, b = _init_linear_padded(k, di, do, compute_dtype)
            enc_w.append(w); enc_b.append(b)
        for k, (di, do) in zip(keys[n_enc:], zip(dec_dims[:-1], dec_dims[1:])):
            w, b = _init_linear_padded(k, di, do, compute_dtype)
            dec_w.append(w); dec_b.append(b)

        # DCN-style AE: ReLU on hidden layers; latent layer and final
        # reconstruction layer are linear.
        self.enc_relu = tuple([True] * (n_enc - 1) + [False])
        self.dec_relu = tuple([True] * (n_dec - 1) + [False])
        self.all_relu = self.enc_relu + self.dec_relu

        self.enc_weights, self.dec_weights = enc_w, dec_w
        self.all_weights = enc_w + dec_w
        self.enc_bias = _pack_biases(enc_b)
        self.dec_bias = _pack_biases(dec_b)
        self.all_bias = _pack_biases(enc_b + dec_b)

        # jit the forward paths once -> single fused-kernel dispatch each.
        self._full_jit = jax.jit(lambda x: self._forward_impl(x, latent=False))
        self._encode_jit = jax.jit(lambda x: self._forward_impl(x, latent=True))
        self._decode_jit = jax.jit(self._decode_impl)

    # --- helpers -------------------------------------------------------------
    def _prep_input(self, x, logical_dim, padded_dim):
        # Stream the input in the (narrow) compute dtype; pad lanes to 128
        # only when the logical width is not already lane-dense.
        x = x.astype(self.compute_dtype)
        if padded_dim != logical_dim:
            x = jnp.pad(x, ((0, 0), (0, padded_dim - logical_dim)))
        return x

    # --- fused Pallas forward -------------------------------------------------
    def _forward_impl(self, x, latent):
        x = self._prep_input(x, self.input_dim, self.input_dim_pad)
        if latent:
            out = fused_mlp(x, self.enc_weights, self.enc_bias, self.enc_relu)
            if self.latent_dim_pad != self.latent_dim:
                out = out[:, :self.latent_dim]
            return out
        out = fused_mlp(x, self.all_weights, self.all_bias, self.all_relu)
        if self.input_dim_pad != self.input_dim:
            out = out[:, :self.input_dim]
        return out

    def _decode_impl(self, z):
        z = self._prep_input(z, self.latent_dim, self.latent_dim_pad)
        out = fused_mlp(z, self.dec_weights, self.dec_bias, self.dec_relu)
        if self.input_dim_pad != self.input_dim:
            out = out[:, :self.input_dim]
        return out

    # Mirrors FeatureExtractor.forward (no self.feature_extractor set).
    def __call__(self, X, latent=False):
        if latent:
            return self._encode_jit(X)
        return self._full_jit(X)

    def encode(self, X):
        return self._encode_jit(X)

    def decode(self, Z):
        return self._decode_jit(Z)

    # --- pure-JAX reference (same padded bf16/f32 math, no Pallas) ------------
    def reference(self, X, latent=False):
        x = self._prep_input(jnp.asarray(X), self.input_dim, self.input_dim_pad)
        if latent:
            weights, bias, relu, out_dim = (self.enc_weights, self.enc_bias,
                                            self.enc_relu, self.latent_dim)
        else:
            weights, bias, relu, out_dim = (self.all_weights, self.all_bias,
                                            self.all_relu, self.input_dim)
        h, n = x, len(weights)
        for li, w in enumerate(weights):
            dout = w.shape[1]
            y = jnp.dot(h, w, preferred_element_type=jnp.float32)
            y = y + bias[li:li + 1, :dout]
            if relu[li]:
                y = jnp.maximum(y, 0.0)
            h = y.astype(self.compute_dtype) if li < n - 1 else y
        return h[:, :out_dim]


# ----------------------------------------------------------------------------
# Main
# ----------------------------------------------------------------------------
if __name__ == "__main__":
    key = jax.random.PRNGKey(0)
    k_param, k_data = jax.random.split(key)

    batch = 50        # not a multiple of the tile -> exercises ragged block
    input_dim = 128   # flattened feature dimension

    model = FeatureExtractorPallas(
        k_param, input_dim=input_dim, hidden_dims=(64, 64), latent_dim=10
    )

    X = jax.random.normal(k_data, (batch, input_dim), dtype=jnp.float32)

    # Full forward (encoder -> decoder reconstruction): one fused kernel.
    recon = jax.block_until_ready(model(X, latent=False))
    assert recon.shape == (batch, input_dim), recon.shape

    # Latent path (encoder only): one fused kernel.
    z = jax.block_until_ready(model(X, latent=True))
    assert z.shape == (batch, model.latent_dim), z.shape

    # Decoder-only path (FeatureExtractor.decode).
    dec = jax.block_until_ready(model.decode(z))
    assert dec.shape == (batch, input_dim), dec.shape

    # Correctness vs pure-JAX reference (same bf16-operand / f32-accum math).
    ref_recon = np.asarray(model.reference(X, latent=False))
    ref_z = np.asarray(model.reference(X, latent=True))
    np.testing.assert_allclose(np.asarray(recon), ref_recon, atol=2e-2, rtol=2e-2)
    np.testing.assert_allclose(np.asarray(z), ref_z, atol=2e-2, rtol=2e-2)

    print("KERNEL_OK")
</pallas_src>

<mosaic_0001>
module attributes {stable_mosaic.version = 11 : i64} {
  func.func @_fused_mlp_kernel(%arg0: i32, %arg1: memref<32x128xbf16, #tpu.memory_space<vmem>>, %arg2: memref<6x128xf32, #tpu.memory_space<vmem>>, %arg3: memref<128x128xbf16, #tpu.memory_space<vmem>>, %arg4: memref<128x128xbf16, #tpu.memory_space<vmem>>, %arg5: memref<128x128xbf16, #tpu.memory_space<vmem>>, %arg6: memref<128x128xbf16, #tpu.memory_space<vmem>>, %arg7: memref<128x128xbf16, #tpu.memory_space<vmem>>, %arg8: memref<128x128xbf16, #tpu.memory_space<vmem>>, %arg9: memref<32x128xf32, #tpu.memory_space<vmem>>) attributes {dimension_semantics = [#tpu.dimension_semantics<parallel>], iteration_bounds = array<i64: 2>, scalar_prefetch = 0 : i64, scratch_operands = 0 : i64, tpu.core_type = #tpu.core_type<tc>, window_params = [{transform_indices = @transform_0, window_bounds = array<i64: 32, 128>}, {pipeline_mode = #tpu.pipeline_mode<synchronous>, transform_indices = @transform_1, window_bounds = array<i64: 6, 128>}, {pipeline_mode = #tpu.pipeline_mode<synchronous>, transform_indices = @transform_2, window_bounds = array<i64: 128, 128>}, {pipeline_mode = #tpu.pipeline_mode<synchronous>, transform_indices = @transform_3, window_bounds = array<i64: 128, 128>}, {pipeline_mode = #tpu.pipeline_mode<synchronous>, transform_indices = @transform_4, window_bounds = array<i64: 128, 128>}, {pipeline_mode = #tpu.pipeline_mode<synchronous>, transform_indices = @transform_5, window_bounds = array<i64: 128, 128>}, {pipeline_mode = #tpu.pipeline_mode<synchronous>, transform_indices = @transform_6, window_bounds = array<i64: 128, 128>}, {pipeline_mode = #tpu.pipeline_mode<synchronous>, transform_indices = @transform_7, window_bounds = array<i64: 128, 128>}, {transform_indices = @transform_8, window_bounds = array<i64: 32, 128>}]} {
    %c0 = arith.constant 0 : index
    %c0_0 = arith.constant 0 : index
    %0 = vector.load %arg1[%c0, %c0_0] : memref<32x128xbf16, #tpu.memory_space<vmem>>, vector<32x128xbf16>
    %c0_1 = arith.constant 0 : index
    %c0_2 = arith.constant 0 : index
    %1 = vector.load %arg3[%c0_1, %c0_2] : memref<128x128xbf16, #tpu.memory_space<vmem>>, vector<128x128xbf16>
    %cst = arith.constant dense<0.000000e+00> : vector<32x128xf32>
    %2 = tpu.matmul %0, %1, %cst {dimension_numbers = #tpu.dot_dimension_numbers<[1], [0], [0], [1], [0, 0, 1, 1], [], []>} : vector<32x128xbf16>, vector<128x128xbf16>, vector<32x128xf32> -> vector<32x128xf32>
    %c0_3 = arith.constant 0 : index
    %c0_4 = arith.constant 0 : index
    %3 = vector.load %arg2[%c0_3, %c0_4] : memref<6x128xf32, #tpu.memory_space<vmem>>, vector<1x128xf32>
    %4 = vector.broadcast %3 : vector<1x128xf32> to vector<32x128xf32>
    %5 = arith.addf %2, %4 : vector<32x128xf32>
    %cst_5 = arith.constant 0.000000e+00 : f32
    %6 = vector.broadcast %cst_5 : f32 to vector<32x128xf32>
    %7 = arith.maximumf %5, %6 : vector<32x128xf32>
    %8 = arith.truncf %7 : vector<32x128xf32> to vector<32x128xbf16>
    %c0_6 = arith.constant 0 : index
    %c0_7 = arith.constant 0 : index
    %9 = vector.load %arg4[%c0_6, %c0_7] : memref<128x128xbf16, #tpu.memory_space<vmem>>, vector<128x128xbf16>
    %cst_8 = arith.constant dense<0.000000e+00> : vector<32x128xf32>
    %10 = tpu.matmul %8, %9, %cst_8 {dimension_numbers = #tpu.dot_dimension_numbers<[1], [0], [0], [1], [0, 0, 1, 1], [], []>} : vector<32x128xbf16>, vector<128x128xbf16>, vector<32x128xf32> -> vector<32x128xf32>
    %c1 = arith.constant 1 : index
    %c0_9 = arith.constant 0 : index
    %11 = vector.load %arg2[%c1, %c0_9] : memref<6x128xf32, #tpu.memory_space<vmem>>, vector<1x128xf32>
    %12 = vector.broadcast %11 : vector<1x128xf32> to vector<32x128xf32>
    %13 = arith.addf %10, %12 : vector<32x128xf32>
    %cst_10 = arith.constant 0.000000e+00 : f32
    %14 = vector.broadcast %cst_10 : f32 to vector<32x128xf32>
    %15 = arith.maximumf %13, %14 : vector<32x128xf32>
    %16 = arith.truncf %15 : vector<32x128xf32> to vector<32x128xbf16>
    %c0_11 = arith.constant 0 : index
    %c0_12 = arith.constant 0 : index
    %17 = vector.load %arg5[%c0_11, %c0_12] : memref<128x128xbf16, #tpu.memory_space<vmem>>, vector<128x128xbf16>
    %cst_13 = arith.constant dense<0.000000e+00> : vector<32x128xf32>
    %18 = tpu.matmul %16, %17, %cst_13 {dimension_numbers = #tpu.dot_dimension_numbers<[1], [0], [0], [1], [0, 0, 1, 1], [], []>} : vector<32x128xbf16>, vector<128x128xbf16>, vector<32x128xf32> -> vector<32x128xf32>
    %c2 = arith.constant 2 : index
    %c0_14 = arith.constant 0 : index
    %19 = vector.load %arg2[%c2, %c0_14] : memref<6x128xf32, #tpu.memory_space<vmem>>, vector<1x128xf32>
    %20 = vector.broadcast %19 : vector<1x128xf32> to vector<32x128xf32>
    %21 = arith.addf %18, %20 : vector<32x128xf32>
    %22 = arith.truncf %21 : vector<32x128xf32> to vector<32x128xbf16>
    %c0_15 = arith.constant 0 : index
    %c0_16 = arith.constant 0 : index
    %23 = vector.load %arg6[%c0_15, %c0_16] : memref<128x128xbf16, #tpu.memory_space<vmem>>, vector<128x128xbf16>
    %cst_17 = arith.constant dense<0.000000e+00> : vector<32x128xf32>
    %24 = tpu.matmul %22, %23, %cst_17 {dimension_numbers = #tpu.dot_dimension_numbers<[1], [0], [0], [1], [0, 0, 1, 1], [], []>} : vector<32x128xbf16>, vector<128x128xbf16>, vector<32x128xf32> -> vector<32x128xf32>
    %c3 = arith.constant 3 : index
    %c0_18 = arith.constant 0 : index
    %25 = vector.load %arg2[%c3, %c0_18] : memref<6x128xf32, #tpu.memory_space<vmem>>, vector<1x128xf32>
    %26 = vector.broadcast %25 : vector<1x128xf32> to vector<32x128xf32>
    %27 = arith.addf %24, %26 : vector<32x128xf32>
    %cst_19 = arith.constant 0.000000e+00 : f32
    %28 = vector.broadcast %cst_19 : f32 to vector<32x128xf32>
    %29 = arith.maximumf %27, %28 : vector<32x128xf32>
    %30 = arith.truncf %29 : vector<32x128xf32> to vector<32x128xbf16>
    %c0_20 = arith.constant 0 : index
    %c0_21 = arith.constant 0 : index
    %31 = vector.load %arg7[%c0_20, %c0_21] : memref<128x128xbf16, #tpu.memory_space<vmem>>, vector<128x128xbf16>
    %cst_22 = arith.constant dense<0.000000e+00> : vector<32x128xf32>
    %32 = tpu.matmul %30, %31, %cst_22 {dimension_numbers = #tpu.dot_dimension_numbers<[1], [0], [0], [1], [0, 0, 1, 1], [], []>} : vector<32x128xbf16>, vector<128x128xbf16>, vector<32x128xf32> -> vector<32x128xf32>
    %c4 = arith.constant 4 : index
    %c0_23 = arith.constant 0 : index
    %33 = vector.load %arg2[%c4, %c0_23] : memref<6x128xf32, #tpu.memory_space<vmem>>, vector<1x128xf32>
    %34 = vector.broadcast %33 : vector<1x128xf32> to vector<32x128xf32>
    %35 = arith.addf %32, %34 : vector<32x128xf32>
    %cst_24 = arith.constant 0.000000e+00 : f32
    %36 = vector.broadcast %cst_24 : f32 to vector<32x128xf32>
    %37 = arith.maximumf %35, %36 : vector<32x128xf32>
    %38 = arith.truncf %37 : vector<32x128xf32> to vector<32x128xbf16>
    %c0_25 = arith.constant 0 : index
    %c0_26 = arith.constant 0 : index
    %39 = vector.load %arg8[%c0_25, %c0_26] : memref<128x128xbf16, #tpu.memory_space<vmem>>, vector<128x128xbf16>
    %cst_27 = arith.constant dense<0.000000e+00> : vector<32x128xf32>
    %40 = tpu.matmul %38, %39, %cst_27 {dimension_numbers = #tpu.dot_dimension_numbers<[1], [0], [0], [1], [0, 0, 1, 1], [], []>} : vector<32x128xbf16>, vector<128x128xbf16>, vector<32x128xf32> -> vector<32x128xf32>
    %c5 = arith.constant 5 : index
    %c0_28 = arith.constant 0 : index
    %41 = vector.load %arg2[%c5, %c0_28] : memref<6x128xf32, #tpu.memory_space<vmem>>, vector<1x128xf32>
    %42 = vector.broadcast %41 : vector<1x128xf32> to vector<32x128xf32>
    %43 = arith.addf %40, %42 : vector<32x128xf32>
    %c0_29 = arith.constant 0 : index
    %c0_30 = arith.constant 0 : index
    %44 = vector.load %arg9[%c0_29, %c0_30] : memref<32x128xf32, #tpu.memory_space<vmem>>, vector<32x128xf32>
    tpu.vector_store %arg9[%c0_29, %c0_30], %43 {strides = array<i32>} : memref<32x128xf32, #tpu.memory_space<vmem>>, vector<32x128xf32>,
    return
  }
  func.func @transform_0(%arg0: i32) -> (i32, i32) {
    %c0_i32 = arith.constant 0 : i32
    %c0_i32_0 = arith.constant 0 : i32
    return %arg0, %c0_i32 : i32, i32
  }
  func.func @transform_1(%arg0: i32) -> (i32, i32) {
    %c0_i32 = arith.constant 0 : i32
    %c0_i32_0 = arith.constant 0 : i32
    %c0_i32_1 = arith.constant 0 : i32
    return %c0_i32, %c0_i32_0 : i32, i32
  }
  func.func @transform_2(%arg0: i32) -> (i32, i32) {
    %c0_i32 = arith.constant 0 : i32
    %c0_i32_0 = arith.constant 0 : i32
    %c0_i32_1 = arith.constant 0 : i32
    return %c0_i32, %c0_i32_0 : i32, i32
  }
  func.func @transform_3(%arg0: i32) -> (i32, i32) {
    %c0_i32 = arith.constant 0 : i32
    %c0_i32_0 = arith.constant 0 : i32
    %c0_i32_1 = arith.constant 0 : i32
    return %c0_i32, %c0_i32_0 : i32, i32
  }
  func.func @transform_4(%arg0: i32) -> (i32, i32) {
    %c0_i32 = arith.constant 0 : i32
    %c0_i32_0 = arith.constant 0 : i32
    %c0_i32_1 = arith.constant 0 : i32
    return %c0_i32, %c0_i32_0 : i32, i32
  }
  func.func @transform_5(%arg0: i32) -> (i32, i32) {
    %c0_i32 = arith.constant 0 : i32
    %c0_i32_0 = arith.constant 0 : i32
    %c0_i32_1 = arith.constant 0 : i32
    return %c0_i32, %c0_i32_0 : i32, i32
  }
  func.func @transform_6(%arg0: i32) -> (i32, i32) {
    %c0_i32 = arith.constant 0 : i32
    %c0_i32_0 = arith.constant 0 : i32
    %c0_i32_1 = arith.constant 0 : i32
    return %c0_i32, %c0_i32_0 : i32, i32
  }
  func.func @transform_7(%arg0: i32) -> (i32, i32) {
    %c0_i32 = arith.constant 0 : i32
    %c0_i32_0 = arith.constant 0 : i32
    %c0_i32_1 = arith.constant 0 : i32
    return %c0_i32, %c0_i32_0 : i32, i32
  }
  func.func @transform_8(%arg0: i32) -> (i32, i32) {
    %c0_i32 = arith.constant 0 : i32
    %c0_i32_0 = arith.constant 0 : i32
    return %arg0, %c0_i32 : i32, i32
  }
}

</mosaic_0001>

<llo_original>
// kernel: _lambda_.1
$region0: #{_lambda_.1}
  #allocation0 [shape = 'u32[]', space=smem, size = 0x4, offset = 0x4, fixed_abs, tag = 'smem constant byte address 0x4 - core index']
  #allocation1 [shape = 'u32[72,128]{1,0:T(1,128)}', space=vmem, size = 0x9000, scoped, tag = 'internal scratch']
  %s0 = inlined_call_operand.vmem [shape: bf16[50,128], index: 0, kind: input, shape index: {}]
  %s1 = inlined_call_operand.vmem [shape: f32[6,128], index: 1, kind: input, shape index: {}]
  %s2 = inlined_call_operand.hbm [shape: bf16[128,128], index: 2, kind: input, shape index: {}]
  %s3 = inlined_call_operand.hbm [shape: bf16[128,128], index: 3, kind: input, shape index: {}]
  %s4 = inlined_call_operand.hbm [shape: bf16[128,128], index: 4, kind: input, shape index: {}]
  %s5 = inlined_call_operand.hbm [shape: bf16[128,128], index: 5, kind: input, shape index: {}]
  %s6 = inlined_call_operand.hbm [shape: bf16[128,128], index: 6, kind: input, shape index: {}]
  %s7 = inlined_call_operand.vmem [shape: bf16[128,128], index: 7, kind: input, shape index: {}]
  %s8 = inlined_call_operand.hbm [shape: f32[50,128], index: 8, kind: output, shape index: {}]
  %s9 = sld [smem:[#allocation0]]
  $region85: #{_lambda_.1} parent=0
    _
  %s11 = ssub.s32 1, %s9
  %s12 = scalar_select 0, %s11, %s9
  $region1: #{_lambda_.1} parent=0
    #allocation2 [shape = 'u8[32768]{0}', space=vmem, size = 0x8000, scoped, tag = 'input window, operand 2, single buffered']
    #allocation3 [shape = 's32[2]{0}', space=sflag, size = 0x8, scoped, tag = 'scoped memory for _lambda_.1']
    #allocation4 [shape = 's32[2]{0}', space=sflag, size = 0x8, scoped, tag = 'scoped memory for _lambda_.1']
    #allocation5 [shape = 'u8[32768]{0}', space=vmem, size = 0x8000, scoped, tag = 'input window, operand 3, single buffered']
    #allocation6 [shape = 's32[1]{0}', space=sflag, size = 0x4, scoped, tag = 'scoped memory for _lambda_.1']
    #allocation7 [shape = 'u8[32768]{0}', space=vmem, size = 0x8000, scoped, tag = 'input window, operand 4, single buffered']
    #allocation8 [shape = 'u8[32768]{0}', space=vmem, size = 0x8000, scoped, tag = 'input window, operand 5, single buffered']
    #allocation9 [shape = 's32[1]{0}', space=sflag, size = 0x4, scoped, tag = 'scoped memory for _lambda_.1']
    #allocation10 [shape = 'u8[32768]{0}', space=vmem, size = 0x8000, scoped, tag = 'input window, operand 6, single buffered']
    #allocation11 [shape = 'u8[32768]{0}', space=vmem, size = 0x8000, scoped, tag = 'output window, operand 0']
    %13 = vsyncpa [#allocation3], 0
    %14 = vsyncpa [#allocation6], 0
    %15 = vsyncpa [#allocation9], 0
    %16 = vsyncpa [#allocation4], 0
    %s17 = scalar_lea.sflag [#allocation4], 1
    %18 = vsyncpa %s17, 0
    loop: start=0, step=1, limit=4
    $region2: #{_lambda_.1} parent=1 // loop_pre_header
      _
    $region3: #{_lambda_.1} parent=1 // loop_header
      %s20 = sphi 0, %s24
      %p21 = scmp.ge.s32.totalorder %s20, 4
      %s30 = sphi 0, %s32
      %s33 = sphi 0, %s30
      %s34 = sphi 0, %s33
      %s50 = sphi 0, %s34
      %s54 = sphi 0, %s54
      %s56 = sphi 0, %s54
      %s57 = sphi 0, %s56
      %s71 = sphi 0, %s57
      %s75 = sphi 0, %s75
      %s77 = sphi 0, %s75
      %s78 = sphi 0, %s77
      %s92 = sphi 0, %s78
      %s96 = sphi 0, %s96
      %s98 = sphi 0, %s96
      %s99 = sphi 0, %s98
      %s113 = sphi 0, %s99
      %s117 = sphi 0, %s117
      %s119 = sphi 0, %s117
      %s120 = sphi 0, %s119
      %s134 = sphi 0, %s120
      %s138 = sphi 0, %s138
      %s140 = sphi 0, %s138
      %s141 = sphi 0, %s140
      %s155 = sphi 0, %s141
      %s159 = sphi 0, %s159
      %s161 = sphi 0, %s159
      %s162 = sphi 0, %s161
      %s176 = sphi 0, %s162
      %s180 = sphi 0, %s180
      %s182 = sphi 0, %s180
      %s183 = sphi 0, %s182
      %s197 = sphi 0, %s183
      %s203 = sphi 0, %s205
      %s206 = sphi 0, %s203
      %s207 = sphi 0, %s206
      %s223 = sphi 0, %s207
    $region4: #{_lambda_.1} parent=1 // loop_header_branch
      %23 = sbr.rel (%p21) target = $region8
    $region5: #{_lambda_.1} parent=1 // loop_body
      %s25 = ssub.s32 %s20, 1
      %s26 = ssub.s32 %s20, 2
      %s27 = sadd.s32 %s20, 1
      %s28 = ssub.s32 %s20, %s27
      %p29 = scmp.eq.s32.totalorder %s28, 0
      %s31 = sadd.s32 %s30, 1
      %s32 = scalar_select %p29, %s30, %s31
      %p35 = pneg %p29
      %p36 = scmp.eq.s32.totalorder %s20, 1
      %p37 = por %p35, %p36
      %p38 = scmp.ne.s32.totalorder %s30, %s33
      %p39 = scmp.eq.s32.totalorder %s20, 0
      %p40 = por %p38, %p39
      %p41 = scmp.ne.s32.totalorder %s30, %s33
      %p42 = scmp.eq.s32.totalorder %s25, 1
      %p43 = por %p41, %p42
      %p44 = scmp.ne.s32.totalorder %s33, %s34
      %p45 = scmp.eq.s32.totalorder %s25, 0
      %p46 = por %p44, %p45
      %p47 = scmp.ne.s32.totalorder %s33, %s34
      %p48 = scmp.eq.s32.totalorder %s26, 1
      %p49 = por %p47, %p48
      %p51 = scmp.ne.s32.totalorder %s34, %s50
      %p52 = scmp.eq.s32.totalorder %s26, 0
      %p53 = por %p51, %p52
      %s55 = sadd.s32 %s54, 1
      %p58 = scmp.eq.s32.totalorder %s20, 1
      %p59 = scmp.ne.s32.totalorder %s54, %s56
      %p60 = scmp.eq.s32.totalorder %s20, 0
      %p61 = por %p59, %p60
      %p62 = scmp.ne.s32.totalorder %s54, %s56
      %p63 = scmp.eq.s32.totalorder %s25, 1
      %p64 = por %p62, %p63
      %p65 = scmp.ne.s32.totalorder %s56, %s57
      %p66 = scmp.eq.s32.totalorder %s25, 0
      %p67 = por %p65, %p66
      %p68 = scmp.ne.s32.totalorder %s56, %s57
      %p69 = scmp.eq.s32.totalorder %s26, 1
      %p70 = por %p68, %p69
      %p72 = scmp.ne.s32.totalorder %s57, %s71
      %p73 = scmp.eq.s32.totalorder %s26, 0
      %p74 = por %p72, %p73
      %s76 = sadd.s32 %s75, 1
      %p79 = scmp.eq.s32.totalorder %s20, 1
      %p80 = scmp.ne.s32.totalorder %s75, %s77
      %p81 = scmp.eq.s32.totalorder %s20, 0
      %p82 = por %p80, %p81
      %p83 = scmp.ne.s32.totalorder %s75, %s77
      %p84 = scmp.eq.s32.totalorder %s25, 1
      %p85 = por %p83, %p84
      %p86 = scmp.ne.s32.totalorder %s77, %s78
      %p87 = scmp.eq.s32.totalorder %s25, 0
      %p88 = por %p86, %p87
      %p89 = scmp.ne.s32.totalorder %s77, %s78
      %p90 = scmp.eq.s32.totalorder %s26, 1
      %p91 = por %p89, %p90
      %p93 = scmp.ne.s32.totalorder %s78, %s92
      %p94 = scmp.eq.s32.totalorder %s26, 0
      %p95 = por %p93, %p94
      %s97 = sadd.s32 %s96, 1
      %p100 = scmp.eq.s32.totalorder %s20, 1
      %p101 = scmp.ne.s32.totalorder %s96, %s98
      %p102 = scmp.eq.s32.totalorder %s20, 0
      %p103 = por %p101, %p102
      %p104 = scmp.ne.s32.totalorder %s96, %s98
      %p105 = scmp.eq.s32.totalorder %s25, 1
      %p106 = por %p104, %p105
      %p107 = scmp.ne.s32.totalorder %s98, %s99
      %p108 = scmp.eq.s32.totalorder %s25, 0
      %p109 = por %p107, %p108
      %p110 = scmp.ne.s32.totalorder %s98, %s99
      %p111 = scmp.eq.s32.totalorder %s26, 1
      %p112 = por %p110, %p111
      %p114 = scmp.ne.s32.totalorder %s99, %s113
      %p115 = scmp.eq.s32.totalorder %s26, 0
      %p116 = por %p114, %p115
      %s118 = sadd.s32 %s117, 1
      %p121 = scmp.eq.s32.totalorder %s20, 1
      %p122 = scmp.ne.s32.totalorder %s117, %s119
      %p123 = scmp.eq.s32.totalorder %s20, 0
      %p124 = por %p122, %p123
      %p125 = scmp.ne.s32.totalorder %s117, %s119
      %p126 = scmp.eq.s32.totalorder %s25, 1
      %p127 = por %p125, %p126
      %p128 = scmp.ne.s32.totalorder %s119, %s120
      %p129 = scmp.eq.s32.totalorder %s25, 0
      %p130 = por %p128, %p129
      %p131 = scmp.ne.s32.totalorder %s119, %s120
      %p132 = scmp.eq.s32.totalorder %s26, 1
      %p133 = por %p131, %p132
      %p135 = scmp.ne.s32.totalorder %s120, %s134
      %p136 = scmp.eq.s32.totalorder %s26, 0
      %p137 = por %p135, %p136
      %s139 = sadd.s32 %s138, 1
      %p142 = scmp.eq.s32.totalorder %s20, 1
      %p143 = scmp.ne.s32.totalorder %s138, %s140
      %p144 = scmp.eq.s32.totalorder %s20, 0
      %p145 = por %p143, %p144
      %p146 = scmp.ne.s32.totalorder %s138, %s140
      %p147 = scmp.eq.s32.totalorder %s25, 1
      %p148 = por %p146, %p147
      %p149 = scmp.ne.s32.totalorder %s140, %s141
      %p150 = scmp.eq.s32.totalorder %s25, 0
      %p151 = por %p149, %p150
      %p152 = scmp.ne.s32.totalorder %s140, %s141
      %p153 = scmp.eq.s32.totalorder %s26, 1
      %p154 = por %p152, %p153
      %p156 = scmp.ne.s32.totalorder %s141, %s155
      %p157 = scmp.eq.s32.totalorder %s26, 0
      %p158 = por %p156, %p157
      %s160 = sadd.s32 %s159, 1
      %p163 = scmp.eq.s32.totalorder %s20, 1
      %p164 = scmp.ne.s32.totalorder %s159, %s161
      %p165 = scmp.eq.s32.totalorder %s20, 0
      %p166 = por %p164, %p165
      %p167 = scmp.ne.s32.totalorder %s159, %s161
      %p168 = scmp.eq.s32.totalorder %s25, 1
      %p169 = por %p167, %p168
      %p170 = scmp.ne.s32.totalorder %s161, %s162
      %p171 = scmp.eq.s32.totalorder %s25, 0
      %p172 = por %p170, %p171
      %p173 = scmp.ne.s32.totalorder %s161, %s162
      %p174 = scmp.eq.s32.totalorder %s26, 1
      %p175 = por %p173, %p174
      %p177 = scmp.ne.s32.totalorder %s162, %s176
      %p178 = scmp.eq.s32.totalorder %s26, 0
      %p179 = por %p177, %p178
      %s181 = sadd.s32 %s180, 1
      %p184 = scmp.eq.s32.totalorder %s20, 1
      %p185 = scmp.ne.s32.totalorder %s180, %s182
      %p186 = scmp.eq.s32.totalorder %s20, 0
      %p187 = por %p185, %p186
      %p188 = scmp.ne.s32.totalorder %s180, %s182
      %p189 = scmp.eq.s32.totalorder %s25, 1
      %p190 = por %p188, %p189
      %p191 = scmp.ne.s32.totalorder %s182, %s183
      %p192 = scmp.eq.s32.totalorder %s25, 0
      %p193 = por %p191, %p192
      %p194 = scmp.ne.s32.totalorder %s182, %s183
      %p195 = scmp.eq.s32.totalorder %s26, 1
      %p196 = por %p194, %p195
      %p198 = scmp.ne.s32.totalorder %s183, %s197
      %p199 = scmp.eq.s32.totalorder %s26, 0
      %p200 = por %p198, %p199
      %s201 = ssub.s32 %s20, %s27
      %p202 = scmp.eq.s32.totalorder %s201, 0
      %s204 = sadd.s32 %s203, 1
      %s205 = scalar_select %p202, %s203, %s204
      %p208 = pneg %p202
      %p209 = scmp.eq.s32.totalorder %s20, 1
      %p210 = por %p208, %p209
      %p211 = scmp.ne.s32.totalorder %s203, %s206
      %p212 = scmp.eq.s32.totalorder %s20, 0
      %p213 = por %p211, %p212
      %p214 = scmp.ne.s32.totalorder %s203, %s206
      %p215 = scmp.eq.s32.totalorder %s25, 1
      %p216 = por %p214, %p215
      %p217 = scmp.ne.s32.totalorder %s206, %s207
      %p218 = scmp.eq.s32.totalorder %s25, 0
      %p219 = por %p217, %p218
      %p220 = scmp.ne.s32.totalorder %s206, %s207
      %p221 = scmp.eq.s32.totalorder %s26, 1
      %p222 = por %p220, %p221
      %p224 = scmp.ne.s32.totalorder %s207, %s223
      %p225 = scmp.eq.s32.totalorder %s26, 0
      %p226 = por %p224, %p225
      %p227 = scmp.le.s32.totalorder 1, %s20
      %p228 = scmp.lt.s32.totalorder %s20, 3
      %p229 = pnand %p227, %p228
      %p230 = pneg %p229
      // Predicated region
      $region9: #{_lambda_.1} parent=5 // pred_check
        _
      $region10: #{_lambda_.1} parent=5 // pred_check_branch
        %232 = sbr.rel (%p229) target = $region12
      $region11: #{_lambda_.1} parent=5 // pred_region
        %s233 = ssub.s32 %s20, 1
        // Predicated region
        $region13: #{_lambda_.1} parent=11 // pred_check
          %p234 = pneg %p67
        $region14: #{_lambda_.1} parent=11 // pred_check_branch
          %236 = sbr.rel (%p234) target = $region16
        $region15: #{_lambda_.1} parent=11 // pred_region
          _
        $region16: #{_lambda_.1} parent=11 // pred_fallthru
          _
        // Predicated region
        $region17: #{_lambda_.1} parent=11 // pred_check
          %p237 = pneg %p88
        $region18: #{_lambda_.1} parent=11 // pred_check_branch
          %239 = sbr.rel (%p237) target = $region20
        $region19: #{_lambda_.1} parent=11 // pred_region
          %241 = vsyncadd [#allocation3], 0
          %s242 = sshll.u32 %s2, 4
          %s243 = int_to_ptr.hbm [resolvable:$true] %s242
          %s244 = sshll.u32 [#allocation2], 4
          %s245 = int_to_ptr.vmem [resolvable:$true] %s244
          %250 = dma.hbm_to_vmem [thread:$0]  %s243, 1024, %s245, [#allocation3], 64, 64, 4
        $region20: #{_lambda_.1} parent=11 // pred_fallthru
          _
        // Predicated region
        $region21: #{_lambda_.1} parent=11 // pred_check
          %p251 = pneg %p109
        $region22: #{_lambda_.1} parent=11 // pred_check_branch
          %253 = sbr.rel (%p251) target = $region24
        $region23: #{_lambda_.1} parent=11 // pred_region
          %255 = vsyncadd [#allocation6], 0
          %s256 = sshll.u32 %s3, 4
          %s257 = int_to_ptr.hbm [resolvable:$true] %s256
          %s258 = sshll.u32 [#allocation5], 4
          %s259 = int_to_ptr.vmem [resolvable:$true] %s258
          %264 = dma.hbm_to_vmem [thread:$0]  %s257, 1024, %s259, [#allocation6], 64, 64, 4
        $region24: #{_lambda_.1} parent=11 // pred_fallthru
          _
        // Predicated region
        $region25: #{_lambda_.1} parent=11 // pred_check
          %p265 = pneg %p130
        $region26: #{_lambda_.1} parent=11 // pred_check_branch
          %267 = sbr.rel (%p265) target = $region28
        $region27: #{_lambda_.1} parent=11 // pred_region
          %269 = vsyncadd [#allocation6], 0
          %s270 = sshll.u32 %s4, 4
          %s271 = int_to_ptr.hbm [resolvable:$true] %s270
          %s272 = sshll.u32 [#allocation7], 4
          %s273 = int_to_ptr.vmem [resolvable:$true] %s272
          %278 = dma.hbm_to_vmem [thread:$0]  %s271, 1024, %s273, [#allocation6], 64, 64, 4
        $region28: #{_lambda_.1} parent=11 // pred_fallthru
          _
        // Predicated region
        $region29: #{_lambda_.1} parent=11 // pred_check
          %p279 = pneg %p151
        $region30: #{_lambda_.1} parent=11 // pred_check_branch
          %281 = sbr.rel (%p279) target = $region32
        $region31: #{_lambda_.1} parent=11 // pred_region
          %283 = vsyncadd [#allocation9], 0
          %s284 = sshll.u32 %s5, 4
          %s285 = int_to_ptr.hbm [resolvable:$true] %s284
          %s286 = sshll.u32 [#allocation8], 4
          %s287 = int_to_ptr.vmem [resolvable:$true] %s286
          %292 = dma.hbm_to_vmem [thread:$0]  %s285, 1024, %s287, [#allocation9], 64, 64, 4
        $region32: #{_lambda_.1} parent=11 // pred_fallthru
          _
        // Predicated region
        $region33: #{_lambda_.1} parent=11 // pred_check
          %p293 = pneg %p172
        $region34: #{_lambda_.1} parent=11 // pred_check_branch
          %295 = sbr.rel (%p293) target = $region36
        $region35: #{_lambda_.1} parent=11 // pred_region
          %297 = vsyncadd [#allocation9], 0
          %s298 = sshll.u32 %s6, 4
          %s299 = int_to_ptr.hbm [resolvable:$true] %s298
          %s300 = sshll.u32 [#allocation10], 4
          %s301 = int_to_ptr.vmem [resolvable:$true] %s300
          %306 = dma.hbm_to_vmem [thread:$0]  %s299, 1024, %s301, [#allocation9], 64, 64, 4
        $region36: #{_lambda_.1} parent=11 // pred_fallthru
          _
        // Predicated region
        $region37: #{_lambda_.1} parent=11 // pred_check
          %p307 = pneg %p193
        $region38: #{_lambda_.1} parent=11 // pred_check_branch
          %309 = sbr.rel (%p307) target = $region40
        $region39: #{_lambda_.1} parent=11 // pred_region
          _
        $region40: #{_lambda_.1} parent=11 // pred_fallthru
          _
      $region12: #{_lambda_.1} parent=5 // pred_fallthru
        _
      %p310 = scmp.lt.s32.totalorder %s20, 2
      // Predicated region
      $region41: #{_lambda_.1} parent=5 // pred_check
        %p311 = pneg %p310
      $region42: #{_lambda_.1} parent=5 // pred_check_branch
        %313 = sbr.rel (%p311) target = $region44
      $region43: #{_lambda_.1} parent=5 // pred_region
        // Predicated region
        $region45: #{_lambda_.1} parent=43 // pred_check
          %p314 = pneg %p40
        $region46: #{_lambda_.1} parent=43 // pred_check_branch
          %316 = sbr.rel (%p314) target = $region48
        $region47: #{_lambda_.1} parent=43 // pred_region
          %s317 = smul.u32 4, %s20
          %s318 = ssub.s32 7, %s317
          %p319 = scmp.lt.s32.totalorder %s318, 4
          %s320 = scalar_select %p319, %s318, 4
          %s321 = smul.u32 4, %s320
          %p322 = scmp.lt.s32.totalorder %s317, 6
          %s323 = scalar_select %p322, %s317, 6
          %s324 = smul.addr %s323, 4
          %s325 = scalar_lea.vmem %s0, %s324
          %s326 = smul.u32 4, %s20
          %s327 = ssub.s32 7, %s326
          %p328 = scmp.lt.s32.totalorder %s327, 4
          %s329 = scalar_select %p328, %s327, 4
          %s330 = smul.u32 4, %s329
        $region48: #{_lambda_.1} parent=43 // pred_fallthru
          _
      $region44: #{_lambda_.1} parent=5 // pred_fallthru
        _
      %p331 = scmp.le.s32.totalorder 1, %s20
      %p332 = scmp.lt.s32.totalorder %s20, 3
      %p333 = pnand %p331, %p332
      %p334 = pneg %p333
      // Predicated region
      $region49: #{_lambda_.1} parent=5 // pred_check
        _
      $region50: #{_lambda_.1} parent=5 // pred_check_branch
        %336 = sbr.rel (%p333) target = $region52
      $region51: #{_lambda_.1} parent=5 // pred_region
        %s337 = ssub.s32 %s20, 1
        // Predicated region
        $region53: #{_lambda_.1} parent=51 // pred_check
          %p338 = pneg %p88
        $region54: #{_lambda_.1} parent=51 // pred_check_branch
          %340 = sbr.rel (%p338) target = $region56
        $region55: #{_lambda_.1} parent=51 // pred_region
          %342 = dma.done [#allocation3], 1024
        $region56: #{_lambda_.1} parent=51 // pred_fallthru
          _
        // Predicated region
        $region57: #{_lambda_.1} parent=51 // pred_check
          %p343 = pneg %p109
        $region58: #{_lambda_.1} parent=51 // pred_check_branch
          %345 = sbr.rel (%p343) target = $region60
        $region59: #{_lambda_.1} parent=51 // pred_region
          %347 = dma.done [#allocation6], 1024
        $region60: #{_lambda_.1} parent=51 // pred_fallthru
          _
        // Predicated region
        $region61: #{_lambda_.1} parent=51 // pred_check
          %p348 = pneg %p130
        $region62: #{_lambda_.1} parent=51 // pred_check_branch
          %350 = sbr.rel (%p348) target = $region64
        $region63: #{_lambda_.1} parent=51 // pred_region
          %352 = dma.done [#allocation6], 1024
        $region64: #{_lambda_.1} parent=51 // pred_fallthru
          _
        // Predicated region
        $region65: #{_lambda_.1} parent=51 // pred_check
          %p353 = pneg %p151
        $region66: #{_lambda_.1} parent=51 // pred_check_branch
          %355 = sbr.rel (%p353) target = $region68
        $region67: #{_lambda_.1} parent=51 // pred_region
          %357 = dma.done [#allocation9], 1024
        $region68: #{_lambda_.1} parent=51 // pred_fallthru
          _
        // Predicated region
        $region69: #{_lambda_.1} parent=51 // pred_check
          %p358 = pneg %p172
        $region70: #{_lambda_.1} parent=51 // pred_check_branch
          %360 = sbr.rel (%p358) target = $region72
        $region71: #{_lambda_.1} parent=51 // pred_region
          %362 = dma.done [#allocation9], 1024
        $region72: #{_lambda_.1} parent=51 // pred_fallthru
          _
        %s363 = smul.u32 4, %s25
        %s364 = ssub.s32 7, %s363
        %p365 = scmp.lt.s32.totalorder %s364, 4
        %s366 = scalar_select %p365, %s364, 4
        %s367 = smul.u32 4, %s366
        %p368 = scmp.lt.s32.totalorder %s363, 6
        %s369 = scalar_select %p368, %s363, 6
        %s370 = smul.addr %s369, 4
        %s371 = scalar_lea.vmem %s0, %s370
        %p372 = pneg %p46
        %p373 = pneg %p43
        %p374 = pneg %p67
        %p375 = pneg %p64
        %p376 = pneg %p88
        %p377 = pneg %p85
        %p378 = pneg %p109
        %p379 = pneg %p106
        %p380 = pneg %p130
        %p381 = pneg %p127
        %p382 = pneg %p151
        %p383 = pneg %p148
        %p384 = pneg %p172
        %p385 = pneg %p169
        %p386 = pneg %p193
        %p387 = pneg %p190
        %p388 = pneg %p219
        %p389 = pneg %p216
        %s390 = sand.u32 %s206, 1
        %s391 = scalar_lea.sflag [#allocation4], %s390
        %s392 = sand.u32 %s206, 1
        %s393 = smul.addr %s392, 32
        %s394 = scalar_lea.vmem [#allocation11], %s393
        %s395 = smul.u32 4, %s25
        %s396 = ssub.s32 7, %s395
        %p397 = scmp.lt.s32.totalorder %s396, 4
        %s398 = scalar_select %p397, %s396, 4
        %s399 = smul.u32 4, %s398
        %p400 = scmp.lt.s32.totalorder %s395, 6
        %s401 = scalar_select %p400, %s395, 6
        %s402 = smul.addr %s401, 4
        %s403 = scalar_lea.vmem %s0, %s402
        %s404 = smul.u32 4, %s25
        %s405 = ssub.s32 7, %s404
        %p406 = scmp.lt.s32.totalorder %s405, 4
        %s407 = scalar_select %p406, %s405, 4
        %s408 = smul.u32 4, %s407
        %s409 = smul.u32 4, %s25
        %s410 = ssub.s32 7, %s409
        %p411 = scmp.lt.s32.totalorder %s410, 4
        %s412 = scalar_select %p411, %s410, 4
        %s413 = smul.u32 8, %s412
        %v414 = vld [vmem:[%s403] sm:$0xf]
        %v415 = vld [vmem:[%s403 + $0x4] sm:$0xf]
        %v416 = vld [vmem:[%s403 + $0x8] sm:$0xf]
        %v417 = vld [vmem:[%s403 + $0xc] sm:$0xf]
        %v418 = vld [vmem:[#allocation2] sm:$0xf]
        %v419 = vld [vmem:[#allocation2 + $0x4] sm:$0xf]
        %v420 = vld [vmem:[#allocation2 + $0x8] sm:$0xf]
        %v421 = vld [vmem:[#allocation2 + $0xc] sm:$0xf]
        %v422 = vld [vmem:[#allocation2 + $0x10] sm:$0xf]
        %v423 = vld [vmem:[#allocation2 + $0x14] sm:$0xf]
        %v424 = vld [vmem:[#allocation2 + $0x18] sm:$0xf]
        %v425 = vld [vmem:[#allocation2 + $0x1c] sm:$0xf]
        %v426 = vld [vmem:[#allocation2 + $0x20] sm:$0xf]
        %v427 = vld [vmem:[#allocation2 + $0x24] sm:$0xf]
        %v428 = vld [vmem:[#allocation2 + $0x28] sm:$0xf]
        %v429 = vld [vmem:[#allocation2 + $0x2c] sm:$0xf]
        %v430 = vld [vmem:[#allocation2 + $0x30] sm:$0xf]
        %v431 = vld [vmem:[#allocation2 + $0x34] sm:$0xf]
        %v432 = vld [vmem:[#allocation2 + $0x38] sm:$0xf]
        %v433 = vld [vmem:[#allocation2 + $0x3c] sm:$0xf]
        %v434 = vld [vmem:[%s1] sm:$0x1]
        %v435 = vperm.slane %v434, 0
        %v440 = vunpack.c.l.b16 %v414
        %v441 = vunpack.c.l.b16 %v415
        %v442 = vunpack.c.l.b16 %v416
        %v443 = vunpack.c.l.b16 %v417
        %v444 = vpack.c.b16 %v441, %v440
        %v445 = vpack.c.b16 %v443, %v442
        %v464 = vunpack.c.l.b16 %v418
        %v465 = vunpack.c.l.b16 %v419
        %v466 = vunpack.c.l.b16 %v420
        %v467 = vunpack.c.l.b16 %v421
        %v468 = vunpack.c.l.b16 %v422
        %v469 = vunpack.c.l.b16 %v423
        %v470 = vunpack.c.l.b16 %v424
        %v471 = vunpack.c.l.b16 %v425
        %v472 = vunpack.c.l.b16 %v426
        %v473 = vunpack.c.l.b16 %v427
        %v474 = vunpack.c.l.b16 %v428
        %v475 = vunpack.c.l.b16 %v429
        %v476 = vunpack.c.l.b16 %v430
        %v477 = vunpack.c.l.b16 %v431
        %v478 = vunpack.c.l.b16 %v432
        %v479 = vunpack.c.l.b16 %v433
        %v480 = vpack.c.b16 %v465, %v464
        %v481 = vpack.c.b16 %v467, %v466
        %v482 = vpack.c.b16 %v469, %v468
        %v483 = vpack.c.b16 %v471, %v470
        %v484 = vpack.c.b16 %v473, %v472
        %v485 = vpack.c.b16 %v475, %v474
        %v486 = vpack.c.b16 %v477, %v476
        %v487 = vpack.c.b16 %v479, %v478
        %496 = vmatpush.bf16.msra.mxu0 %v487
        %497 = vmatpush.bf16.msra.mxu0 %v486
        %498 = vmatpush.bf16.msra.mxu0 %v485
        %499 = vmatpush.bf16.msra.mxu0 %v484
        %500 = vmatpush.bf16.msra.mxu0 %v483
        %501 = vmatpush.bf16.msra.mxu0 %v482
        %502 = vmatpush.bf16.msra.mxu0 %v481
        %503 = vmatpush.bf16.msra.mxu0 %v480
        %504 = vmatmul.bf16.gmra.mxu0 %v444
        %v505 = vpop.f32.mrf.mxu0
        %v506 = vadd.f32 %v435, %v505
        %v507 = vpop.f32.mrf.mxu0
        %v508 = vadd.f32 %v435, %v507
        %509 = vmatmul.bf16.gmra.mxu0 %v445
        %v510 = vpop.f32.mrf.mxu0
        %v511 = vadd.f32 %v435, %v510
        %v512 = vpop.f32.mrf.mxu0
        %v513 = vadd.f32 %v435, %v512
        %514 = vdwg.mxu0
        %v515 = vmax.f32 %v506, 0.0
        %v516 = vmax.f32 %v508, 0.0
        %v517 = vmax.f32 %v511, 0.0
        %v518 = vmax.f32 %v513, 0.0
        %v519 = vpack.c.bf16 %v516, %v515
        %v520 = vpack.c.bf16 %v518, %v517
        %v521 = vld [vmem:[#allocation5] sm:$0xf]
        %v522 = vld [vmem:[#allocation5 + $0x4] sm:$0xf]
        %v523 = vld [vmem:[#allocation5 + $0x8] sm:$0xf]
        %v524 = vld [vmem:[#allocation5 + $0xc] sm:$0xf]
        %v525 = vld [vmem:[#allocation5 + $0x10] sm:$0xf]
        %v526 = vld [vmem:[#allocation5 + $0x14] sm:$0xf]
        %v527 = vld [vmem:[#allocation5 + $0x18] sm:$0xf]
        %v528 = vld [vmem:[#allocation5 + $0x1c] sm:$0xf]
        %v529 = vld [vmem:[#allocation5 + $0x20] sm:$0xf]
        %v530 = vld [vmem:[#allocation5 + $0x24] sm:$0xf]
        %v531 = vld [vmem:[#allocation5 + $0x28] sm:$0xf]
        %v532 = vld [vmem:[#allocation5 + $0x2c] sm:$0xf]
        %v533 = vld [vmem:[#allocation5 + $0x30] sm:$0xf]
        %v534 = vld [vmem:[#allocation5 + $0x34] sm:$0xf]
        %v535 = vld [vmem:[#allocation5 + $0x38] sm:$0xf]
        %v536 = vld [vmem:[#allocation5 + $0x3c] sm:$0xf]
        %v537 = vld [vmem:[%s1 + $0x1] sm:$0x1]
        %v538 = vperm.slane %v537, 0
        %v555 = vunpack.c.l.b16 %v521
        %v556 = vunpack.c.l.b16 %v522
        %v557 = vunpack.c.l.b16 %v523
        %v558 = vunpack.c.l.b16 %v524
        %v559 = vunpack.c.l.b16 %v525
        %v560 = vunpack.c.l.b16 %v526
        %v561 = vunpack.c.l.b16 %v527
        %v562 = vunpack.c.l.b16 %v528
        %v563 = vunpack.c.l.b16 %v529
        %v564 = vunpack.c.l.b16 %v530
        %v565 = vunpack.c.l.b16 %v531
        %v566 = vunpack.c.l.b16 %v532
        %v567 = vunpack.c.l.b16 %v533
        %v568 = vunpack.c.l.b16 %v534
        %v569 = vunpack.c.l.b16 %v535
        %v570 = vunpack.c.l.b16 %v536
        %v571 = vpack.c.b16 %v556, %v555
        %v572 = vpack.c.b16 %v558, %v557
        %v573 = vpack.c.b16 %v560, %v559
        %v574 = vpack.c.b16 %v562, %v561
        %v575 = vpack.c.b16 %v564, %v563
        %v576 = vpack.c.b16 %v566, %v565
        %v577 = vpack.c.b16 %v568, %v567
        %v578 = vpack.c.b16 %v570, %v569
        %587 = vmatpush.bf16.msra.mxu0 %v578
        %588 = vmatpush.bf16.msra.mxu0 %v577
        %589 = vmatpush.bf16.msra.mxu0 %v576
        %590 = vmatpush.bf16.msra.mxu0 %v575
        %591 = vmatpush.bf16.msra.mxu0 %v574
        %592 = vmatpush.bf16.msra.mxu0 %v573
        %593 = vmatpush.bf16.msra.mxu0 %v572
        %594 = vmatpush.bf16.msra.mxu0 %v571
        %595 = vmatmul.bf16.gmra.mxu0 %v519
        %v596 = vpop.f32.mrf.mxu0
        %v597 = vadd.f32 %v538, %v596
        %v598 = vpop.f32.mrf.mxu0
        %v599 = vadd.f32 %v538, %v598
        %600 = vmatmul.bf16.gmra.mxu0 %v520
        %v601 = vpop.f32.mrf.mxu0
        %v602 = vadd.f32 %v538, %v601
        %v603 = vpop.f32.mrf.mxu0
        %v604 = vadd.f32 %v538, %v603
        %605 = vdwg.mxu0
        %v606 = vmax.f32 %v597, 0.0
        %v607 = vmax.f32 %v599, 0.0
        %v608 = vmax.f32 %v602, 0.0
        %v609 = vmax.f32 %v604, 0.0
        %v610 = vpack.c.bf16 %v607, %v606
        %v611 = vpack.c.bf16 %v609, %v608
        %v612 = vld [vmem:[#allocation7] sm:$0xf]
        %v613 = vld [vmem:[#allocation7 + $0x4] sm:$0xf]
        %v614 = vld [vmem:[#allocation7 + $0x8] sm:$0xf]
        %v615 = vld [vmem:[#allocation7 + $0xc] sm:$0xf]
        %v616 = vld [vmem:[#allocation7 + $0x10] sm:$0xf]
        %v617 = vld [vmem:[#allocation7 + $0x14] sm:$0xf]
        %v618 = vld [vmem:[#allocation7 + $0x18] sm:$0xf]
        %v619 = vld [vmem:[#allocation7 + $0x1c] sm:$0xf]
        %v620 = vld [vmem:[#allocation7 + $0x20] sm:$0xf]
        %v621 = vld [vmem:[#allocation7 + $0x24] sm:$0xf]
        %v622 = vld [vmem:[#allocation7 + $0x28] sm:$0xf]
        %v623 = vld [vmem:[#allocation7 + $0x2c] sm:$0xf]
        %v624 = vld [vmem:[#allocation7 + $0x30] sm:$0xf]
        %v625 = vld [vmem:[#allocation7 + $0x34] sm:$0xf]
        %v626 = vld [vmem:[#allocation7 + $0x38] sm:$0xf]
        %v627 = vld [vmem:[#allocation7 + $0x3c] sm:$0xf]
        %v628 = vld [vmem:[%s1 + $0x2] sm:$0x1]
        %v629 = vperm.slane %v628, 0
        %v646 = vunpack.c.l.b16 %v612
        %v647 = vunpack.c.l.b16 %v613
        %v648 = vunpack.c.l.b16 %v614
        %v649 = vunpack.c.l.b16 %v615
        %v650 = vunpack.c.l.b16 %v616
        %v651 = vunpack.c.l.b16 %v617
        %v652 = vunpack.c.l.b16 %v618
        %v653 = vunpack.c.l.b16 %v619
        %v654 = vunpack.c.l.b16 %v620
        %v655 = vunpack.c.l.b16 %v621
        %v656 = vunpack.c.l.b16 %v622
        %v657 = vunpack.c.l.b16 %v623
        %v658 = vunpack.c.l.b16 %v624
        %v659 = vunpack.c.l.b16 %v625
        %v660 = vunpack.c.l.b16 %v626
        %v661 = vunpack.c.l.b16 %v627
        %v662 = vpack.c.b16 %v647, %v646
        %v663 = vpack.c.b16 %v649, %v648
        %v664 = vpack.c.b16 %v651, %v650
        %v665 = vpack.c.b16 %v653, %v652
        %v666 = vpack.c.b16 %v655, %v654
        %v667 = vpack.c.b16 %v657, %v656
        %v668 = vpack.c.b16 %v659, %v658
        %v669 = vpack.c.b16 %v661, %v660
        %678 = vmatpush.bf16.msra.mxu0 %v669
        %679 = vmatpush.bf16.msra.mxu0 %v668
        %680 = vmatpush.bf16.msra.mxu0 %v667
        %681 = vmatpush.bf16.msra.mxu0 %v666
        %682 = vmatpush.bf16.msra.mxu0 %v665
        %683 = vmatpush.bf16.msra.mxu0 %v664
        %684 = vmatpush.bf16.msra.mxu0 %v663
        %685 = vmatpush.bf16.msra.mxu0 %v662
        %686 = vmatmul.bf16.gmra.mxu0 %v610
        %v687 = vpop.f32.mrf.mxu0
        %v688 = vadd.f32 %v629, %v687
        %v689 = vpop.f32.mrf.mxu0
        %v690 = vadd.f32 %v629, %v689
        %691 = vmatmul.bf16.gmra.mxu0 %v611
        %v692 = vpop.f32.mrf.mxu0
        %v693 = vadd.f32 %v629, %v692
        %v694 = vpop.f32.mrf.mxu0
        %v695 = vadd.f32 %v629, %v694
        %696 = vdwg.mxu0
        %v697 = vpack.c.bf16 %v690, %v688
        %v698 = vpack.c.bf16 %v695, %v693
        %v699 = vld [vmem:[#allocation8] sm:$0xf]
        %v700 = vld [vmem:[#allocation8 + $0x4] sm:$0xf]
        %v701 = vld [vmem:[#allocation8 + $0x8] sm:$0xf]
        %v702 = vld [vmem:[#allocation8 + $0xc] sm:$0xf]
        %v703 = vld [vmem:[#allocation8 + $0x10] sm:$0xf]
        %v704 = vld [vmem:[#allocation8 + $0x14] sm:$0xf]
        %v705 = vld [vmem:[#allocation8 + $0x18] sm:$0xf]
        %v706 = vld [vmem:[#allocation8 + $0x1c] sm:$0xf]
        %v707 = vld [vmem:[#allocation8 + $0x20] sm:$0xf]
        %v708 = vld [vmem:[#allocation8 + $0x24] sm:$0xf]
        %v709 = vld [vmem:[#allocation8 + $0x28] sm:$0xf]
        %v710 = vld [vmem:[#allocation8 + $0x2c] sm:$0xf]
        %v711 = vld [vmem:[#allocation8 + $0x30] sm:$0xf]
        %v712 = vld [vmem:[#allocation8 + $0x34] sm:$0xf]
        %v713 = vld [vmem:[#allocation8 + $0x38] sm:$0xf]
        %v714 = vld [vmem:[#allocation8 + $0x3c] sm:$0xf]
        %v715 = vld [vmem:[%s1 + $0x3] sm:$0x1]
        %v716 = vperm.slane %v715, 0
        %v733 = vunpack.c.l.b16 %v699
        %v734 = vunpack.c.l.b16 %v700
        %v735 = vunpack.c.l.b16 %v701
        %v736 = vunpack.c.l.b16 %v702
        %v737 = vunpack.c.l.b16 %v703
        %v738 = vunpack.c.l.b16 %v704
        %v739 = vunpack.c.l.b16 %v705
        %v740 = vunpack.c.l.b16 %v706
        %v741 = vunpack.c.l.b16 %v707
        %v742 = vunpack.c.l.b16 %v708
        %v743 = vunpack.c.l.b16 %v709
        %v744 = vunpack.c.l.b16 %v710
        %v745 = vunpack.c.l.b16 %v711
        %v746 = vunpack.c.l.b16 %v712
        %v747 = vunpack.c.l.b16 %v713
        %v748 = vunpack.c.l.b16 %v714
        %v749 = vpack.c.b16 %v734, %v733
        %v750 = vpack.c.b16 %v736, %v735
        %v751 = vpack.c.b16 %v738, %v737
        %v752 = vpack.c.b16 %v740, %v739
        %v753 = vpack.c.b16 %v742, %v741
        %v754 = vpack.c.b16 %v744, %v743
        %v755 = vpack.c.b16 %v746, %v745
        %v756 = vpack.c.b16 %v748, %v747
        %765 = vmatpush.bf16.msra.mxu0 %v756
        %766 = vmatpush.bf16.msra.mxu0 %v755
        %767 = vmatpush.bf16.msra.mxu0 %v754
        %768 = vmatpush.bf16.msra.mxu0 %v753
        %769 = vmatpush.bf16.msra.mxu0 %v752
        %770 = vmatpush.bf16.msra.mxu0 %v751
        %771 = vmatpush.bf16.msra.mxu0 %v750
        %772 = vmatpush.bf16.msra.mxu0 %v749
        %773 = vmatmul.bf16.gmra.mxu0 %v697
        %v774 = vpop.f32.mrf.mxu0
        %v775 = vadd.f32 %v716, %v774
        %v776 = vpop.f32.mrf.mxu0
        %v777 = vadd.f32 %v716, %v776
        %778 = vmatmul.bf16.gmra.mxu0 %v698
        %v779 = vpop.f32.mrf.mxu0
        %v780 = vadd.f32 %v716, %v779
        %v781 = vpop.f32.mrf.mxu0
        %v782 = vadd.f32 %v716, %v781
        %783 = vdwg.mxu0
        %v784 = vmax.f32 %v775, 0.0
        %v785 = vmax.f32 %v777, 0.0
        %v786 = vmax.f32 %v780, 0.0
        %v787 = vmax.f32 %v782, 0.0
        %v788 = vpack.c.bf16 %v785, %v784
        %v789 = vpack.c.bf16 %v787, %v786
        %v790 = vld [vmem:[#allocation10] sm:$0xf]
        %v791 = vld [vmem:[#allocation10 + $0x4] sm:$0xf]
        %v792 = vld [vmem:[#allocation10 + $0x8] sm:$0xf]
        %v793 = vld [vmem:[#allocation10 + $0xc] sm:$0xf]
        %v794 = vld [vmem:[#allocation10 + $0x10] sm:$0xf]
        %v795 = vld [vmem:[#allocation10 + $0x14] sm:$0xf]
        %v796 = vld [vmem:[#allocation10 + $0x18] sm:$0xf]
        %v797 = vld [vmem:[#allocation10 + $0x1c] sm:$0xf]
        %v798 = vld [vmem:[#allocation10 + $0x20] sm:$0xf]
        %v799 = vld [vmem:[#allocation10 + $0x24] sm:$0xf]
        %v800 = vld [vmem:[#allocation10 + $0x28] sm:$0xf]
        %v801 = vld [vmem:[#allocation10 + $0x2c] sm:$0xf]
        %v802 = vld [vmem:[#allocation10 + $0x30] sm:$0xf]
        %v803 = vld [vmem:[#allocation10 + $0x34] sm:$0xf]
        %v804 = vld [vmem:[#allocation10 + $0x38] sm:$0xf]
        %v805 = vld [vmem:[#allocation10 + $0x3c] sm:$0xf]
        %v806 = vld [vmem:[%s1 + $0x4] sm:$0x1]
        %v807 = vperm.slane %v806, 0
        %v824 = vunpack.c.l.b16 %v790
        %v825 = vunpack.c.l.b16 %v791
        %v826 = vunpack.c.l.b16 %v792
        %v827 = vunpack.c.l.b16 %v793
        %v828 = vunpack.c.l.b16 %v794
        %v829 = vunpack.c.l.b16 %v795
        %v830 = vunpack.c.l.b16 %v796
        %v831 = vunpack.c.l.b16 %v797
        %v832 = vunpack.c.l.b16 %v798
        %v833 = vunpack.c.l.b16 %v799
        %v834 = vunpack.c.l.b16 %v800
        %v835 = vunpack.c.l.b16 %v801
        %v836 = vunpack.c.l.b16 %v802
        %v837 = vunpack.c.l.b16 %v803
        %v838 = vunpack.c.l.b16 %v804
        %v839 = vunpack.c.l.b16 %v805
        %v840 = vpack.c.b16 %v825, %v824
        %v841 = vpack.c.b16 %v827, %v826
        %v842 = vpack.c.b16 %v829, %v828
        %v843 = vpack.c.b16 %v831, %v830
        %v844 = vpack.c.b16 %v833, %v832
        %v845 = vpack.c.b16 %v835, %v834
        %v846 = vpack.c.b16 %v837, %v836
        %v847 = vpack.c.b16 %v839, %v838
        %856 = vmatpush.bf16.msra.mxu0 %v847
        %857 = vmatpush.bf16.msra.mxu0 %v846
        %858 = vmatpush.bf16.msra.mxu0 %v845
        %859 = vmatpush.bf16.msra.mxu0 %v844
        %860 = vmatpush.bf16.msra.mxu0 %v843
        %861 = vmatpush.bf16.msra.mxu0 %v842
        %862 = vmatpush.bf16.msra.mxu0 %v841
        %863 = vmatpush.bf16.msra.mxu0 %v840
        %864 = vmatmul.bf16.gmra.mxu0 %v788
        %v865 = vpop.f32.mrf.mxu0
        %v866 = vadd.f32 %v807, %v865
        %v867 = vpop.f32.mrf.mxu0
        %v868 = vadd.f32 %v807, %v867
        %869 = vmatmul.bf16.gmra.mxu0 %v789
        %v870 = vpop.f32.mrf.mxu0
        %v871 = vadd.f32 %v807, %v870
        %v872 = vpop.f32.mrf.mxu0
        %v873 = vadd.f32 %v807, %v872
        %874 = vdwg.mxu0
        %v875 = vmax.f32 %v866, 0.0
        %v876 = vmax.f32 %v868, 0.0
        %v877 = vmax.f32 %v871, 0.0
        %v878 = vmax.f32 %v873, 0.0
        %v879 = vpack.c.bf16 %v876, %v875
        %v880 = vpack.c.bf16 %v878, %v877
        %v881 = vld [vmem:[%s7] sm:$0xf]
        %v882 = vld [vmem:[%s7 + $0x4] sm:$0xf]
        %v883 = vld [vmem:[%s7 + $0x8] sm:$0xf]
        %v884 = vld [vmem:[%s7 + $0xc] sm:$0xf]
        %v885 = vld [vmem:[%s7 + $0x10] sm:$0xf]
        %v886 = vld [vmem:[%s7 + $0x14] sm:$0xf]
        %v887 = vld [vmem:[%s7 + $0x18] sm:$0xf]
        %v888 = vld [vmem:[%s7 + $0x1c] sm:$0xf]
        %v889 = vld [vmem:[%s7 + $0x20] sm:$0xf]
        %v890 = vld [vmem:[%s7 + $0x24] sm:$0xf]
        %v891 = vld [vmem:[%s7 + $0x28] sm:$0xf]
        %v892 = vld [vmem:[%s7 + $0x2c] sm:$0xf]
        %v893 = vld [vmem:[%s7 + $0x30] sm:$0xf]
        %v894 = vld [vmem:[%s7 + $0x34] sm:$0xf]
        %v895 = vld [vmem:[%s7 + $0x38] sm:$0xf]
        %v896 = vld [vmem:[%s7 + $0x3c] sm:$0xf]
        %v897 = vld [vmem:[%s1 + $0x5] sm:$0x1]
        %v898 = vperm.slane %v897, 0
        %v915 = vunpack.c.l.b16 %v881
        %v916 = vunpack.c.l.b16 %v882
        %v917 = vunpack.c.l.b16 %v883
        %v918 = vunpack.c.l.b16 %v884
        %v919 = vunpack.c.l.b16 %v885
        %v920 = vunpack.c.l.b16 %v886
        %v921 = vunpack.c.l.b16 %v887
        %v922 = vunpack.c.l.b16 %v888
        %v923 = vunpack.c.l.b16 %v889
        %v924 = vunpack.c.l.b16 %v890
        %v925 = vunpack.c.l.b16 %v891
        %v926 = vunpack.c.l.b16 %v892
        %v927 = vunpack.c.l.b16 %v893
        %v928 = vunpack.c.l.b16 %v894
        %v929 = vunpack.c.l.b16 %v895
        %v930 = vunpack.c.l.b16 %v896
        %v931 = vpack.c.b16 %v916, %v915
        %v932 = vpack.c.b16 %v918, %v917
        %v933 = vpack.c.b16 %v920, %v919
        %v934 = vpack.c.b16 %v922, %v921
        %v935 = vpack.c.b16 %v924, %v923
        %v936 = vpack.c.b16 %v926, %v925
        %v937 = vpack.c.b16 %v928, %v927
        %v938 = vpack.c.b16 %v930, %v929
        %947 = vmatpush.bf16.msra.mxu0 %v938
        %948 = vmatpush.bf16.msra.mxu0 %v937
        %949 = vmatpush.bf16.msra.mxu0 %v936
        %950 = vmatpush.bf16.msra.mxu0 %v935
        %951 = vmatpush.bf16.msra.mxu0 %v934
        %952 = vmatpush.bf16.msra.mxu0 %v933
        %953 = vmatpush.bf16.msra.mxu0 %v932
        %954 = vmatpush.bf16.msra.mxu0 %v931
        %955 = vmatmul.bf16.gmra.mxu0 %v879
        %v956 = vpop.f32.mrf.mxu0
        %v957 = vadd.f32 %v898, %v956
        %v958 = vpop.f32.mrf.mxu0
        %v959 = vadd.f32 %v898, %v958
        %960 = vmatmul.bf16.gmra.mxu0 %v880
        %v961 = vpop.f32.mrf.mxu0
        %v962 = vadd.f32 %v898, %v961
        %v963 = vpop.f32.mrf.mxu0
        %v964 = vadd.f32 %v898, %v963
        %965 = vdwg.mxu0
        %966 = vst [vmem:[%s394] sm:$0xff] %v957
        %967 = vst [vmem:[%s394 + $0x8] sm:$0xff] %v959
        %968 = vst [vmem:[%s394 + $0x10] sm:$0xff] %v962
        %969 = vst [vmem:[%s394 + $0x18] sm:$0xff] %v964
        %s970 = sand.u32 %s206, 1
        %s971 = scalar_lea.sflag [#allocation4], %s970
        %s972 = sand.u32 %s206, 1
        %s973 = smul.addr %s972, 32
        %s974 = scalar_lea.vmem [#allocation11], %s973
        // Predicated region
        $region73: #{_lambda_.1} parent=51 // pred_check
          %p975 = pneg %p216
        $region74: #{_lambda_.1} parent=51 // pred_check_branch
          %977 = sbr.rel (%p975) target = $region76
        $region75: #{_lambda_.1} parent=51 // pred_region
          %s978 = smul.u32 4, %s25
          %s979 = ssub.s32 7, %s978
          %p980 = scmp.lt.s32.totalorder %s979, 4
          %s981 = scalar_select %p980, %s979, 4
          %s982 = smul.u32 8, %s981
          %s983 = ssub.s32 32, %s982
          %s984 = sshll.u32 %s983, 4
          %985 = vsyncadd %s971, %s984
          %p986 = scmp.ne.s32.totalorder 0, %s982
          %s987 = smul.addr %s978, 8
          %s988 = scalar_lea.hbm %s8, %s987
          %s989 = smul.u32 8, %s981
          %s990 = sshll.u32 %s974, 4
          %s991 = int_to_ptr.vmem [resolvable:$true] %s990
          %s992 = sshll.u32 %s988, 4
          %s993 = int_to_ptr.hbm [resolvable:$true] %s992
          %s994 = sshll.u32 %s989, 4
          %998 = dma.vmem_to_hbm [thread:$0]  (%p986), %s991, %s994, %s993, %s971, 128, 128, 8
        $region76: #{_lambda_.1} parent=51 // pred_fallthru
          _
      $region52: #{_lambda_.1} parent=5 // pred_fallthru
        _
      %p999 = scmp.le.s32.totalorder 2, %s20
      // Predicated region
      $region77: #{_lambda_.1} parent=5 // pred_check
        %p1000 = pneg %p999
      $region78: #{_lambda_.1} parent=5 // pred_check_branch
        %1002 = sbr.rel (%p1000) target = $region80
      $region79: #{_lambda_.1} parent=5 // pred_region
        %s1003 = ssub.s32 %s20, 2
        // Predicated region
        $region81: #{_lambda_.1} parent=79 // pred_check
          %p1004 = pneg %p222
        $region82: #{_lambda_.1} parent=79 // pred_check_branch
          %1006 = sbr.rel (%p1004) target = $region84
        $region83: #{_lambda_.1} parent=79 // pred_region
          %s1007 = sand.u32 %s207, 1
          %s1008 = scalar_lea.sflag [#allocation4], %s1007
          %s1009 = sand.u32 %s207, 1
          %s1010 = smul.addr %s1009, 32
          %s1011 = scalar_lea.vmem [#allocation11], %s1010
          %1013 = dma.done %s1008, 512
        $region84: #{_lambda_.1} parent=79 // pred_fallthru
          _
      $region80: #{_lambda_.1} parent=5 // pred_fallthru
        _
    $region6: #{_lambda_.1} parent=1 // loop_footer
      %s24 = sadd.s32 1, %s20
    $region7: #{_lambda_.1} parent=1 // loop_footer_branch
      %19 = sbr.rel target = $region3
    $region8: #{_lambda_.1} parent=1 // loop_exit
      _
    %1014 = vsyncpa [#allocation3], 1
    %s1015 = scalar_lea.sflag [#allocation3], 1
    %1016 = vsyncpa %s1015, 1
    %1017 = vsyncpa [#allocation6], 1
    %1018 = vsyncpa [#allocation9], 1
    %1019 = vsyncpa [#allocation4], 1
    %s1020 = scalar_lea.sflag [#allocation4], 1
    %1021 = vsyncpa %s1020, 1

</llo_original>
